<compile_context>
chip_gen: v7x
topology: tpu7x:2x2x1
jax: 0.10.0
libtpu: 0.0.40
codegen_flags: <defaults>
</compile_context>

<pallas_src>
import functools

import jax
import jax.numpy as jnp
from jax.experimental import pallas as pl
from jax.experimental.pallas import tpu as pltpu


LANE = 128


def _round_up(x, m):
    return (x + m - 1) // m * m


def _prefers_bf16_transcendentals():
    """True on chips with a bf16 EUP (v6e / v7x); keep f32 exp on v5e and older."""
    try:
        kind = jax.devices()[0].device_kind.lower()
    except Exception:
        return True
    return not any(tag in kind for tag in ("v2", "v3", "v4", "v5"))


def _choose_batch_tile(B, max_tile=512):
    """Pick (tile_b, padded_B).

    Large tiles amortize per-grid-step overhead and fill the MXU; the adaptive
    choice avoids gross zero-padding, and we prefer >=2 grid steps so the
    'parallel' batch axis can shard across v7x's two TensorCores.
    """
    b8 = _round_up(B, 8)
    if b8 <= 2 * max_tile:
        if b8 >= 256:
            tb = _round_up(b8 // 2, 8)          # two grid steps -> megacore
            return tb, _round_up(b8, tb)
        return b8, b8                           # tiny batch: single tile
    # Large batch: biggest tile in {512, 256, 128} wasting <=12.5% on padding.
    for tb in (max_tile, max_tile // 2, max_tile // 4):
        b_pad = _round_up(B, tb)
        if (b_pad - B) * 8 <= B:
            return tb, b_pad
    tb = max_tile // 4
    return tb, _round_up(B, tb)


# ----------------------------------------------------------------------------- kernel
def dnn_kernel(x_ref, w1_ref, b1_ref, w2_ref, b2_ref, w3_ref, b3_ref, o_ref,
               *, bf16_sigmoid):
    if bf16_sigmoid:
        def sigmoid(v):
            # exp rides the bf16 EUP (v6e/v7x, ~2x f32 rate); rcp stays f32 vrcp.
            e = jnp.exp(-v.astype(jnp.bfloat16)).astype(jnp.float32)
            return pl.reciprocal(1.0 + e, approx=True)
    else:
        def sigmoid(v):
            # f32-only EUP path (v5e).
            return pl.reciprocal(1.0 + jnp.exp(-v), approx=True)

    # Layer 1: Linear(160 -> 512-padded) + Sigmoid
    x = x_ref[...].astype(jnp.bfloat16)
    h1 = jnp.dot(x, w1_ref[...], preferred_element_type=jnp.float32)
    h1 = sigmoid(h1 + b1_ref[...])

    # Layer 2: Linear(512 -> 256-padded) + Sigmoid
    h2 = jnp.dot(h1.astype(jnp.bfloat16), w2_ref[...],
                 preferred_element_type=jnp.float32)
    h2 = sigmoid(h2 + b2_ref[...])

    # Final layer: Linear(256 -> 10), no activation; store straight into the
    # unpadded (tb, 10) output block (last dim == full dim -> legal block).
    out = jnp.dot(h2.astype(jnp.bfloat16), w3_ref[...],
                  preferred_element_type=jnp.float32)
    o_ref[...] = (out + b3_ref[...]).astype(o_ref.dtype)


# ----------------------------------------------------------------------------- wrapper
def dnn_forward(x, padded_params, output_dim, *, max_tile=512):
    """x: (B, F_in) f32.  padded_params: hidden-lane-padded bf16 W / f32 b."""
    w1, b1, w2, b2, w3, b3 = padded_params
    B, f_in = x.shape
    h1p, h2p = w1.shape[1], w2.shape[1]
    out_dim = w3.shape[1]
    assert out_dim == output_dim

    tb, b_pad = _choose_batch_tile(B, max_tile)
    if b_pad != B:
        x = jnp.pad(x, ((0, b_pad - B), (0, 0)))
    grid = (b_pad // tb,)

    # Advisory cost estimate for the XLA scheduler.
    flops = 2 * b_pad * (f_in * h1p + h1p * h2p + h2p * out_dim)
    transcendentals = b_pad * (h1p + h2p)                       # the two sigmoids
    bytes_accessed = (x.size * x.dtype.itemsize
                      + sum(int(p.size) * p.dtype.itemsize for p in padded_params)
                      + b_pad * out_dim * 4)

    tile_spec = lambda i: (i, 0)        # activations / output: new batch tile per step
    resident = lambda i: (0, 0)         # weights / biases: same (VMEM-resident) block

    kernel = functools.partial(dnn_kernel,
                               bf16_sigmoid=_prefers_bf16_transcendentals())

    out = pl.pallas_call(
        kernel,
        out_shape=jax.ShapeDtypeStruct((b_pad, out_dim), jnp.float32),
        grid_spec=pltpu.PrefetchScalarGridSpec(
            num_scalar_prefetch=0,
            grid=grid,
            in_specs=[
                pl.BlockSpec((tb, f_in), tile_spec),   # x tile
                pl.BlockSpec(w1.shape, resident),
                pl.BlockSpec(b1.shape, resident),
                pl.BlockSpec(w2.shape, resident),
                pl.BlockSpec(b2.shape, resident),
                pl.BlockSpec(w3.shape, resident),
                pl.BlockSpec(b3.shape, resident),
            ],
            out_specs=pl.BlockSpec((tb, out_dim), tile_spec),
        ),
        compiler_params=pltpu.CompilerParams(
            dimension_semantics=("parallel",),          # megacore-shard the batch axis
        ),
        cost_estimate=pl.CostEstimate(
            flops=flops,
            transcendentals=transcendentals,
            bytes_accessed=bytes_accessed,
        ),
    )(x, w1, b1, w2, b2, w3, b3)

    return out if b_pad == B else out[:B]


# ----------------------------------------------------------------------------- params
def init_params(key, neurons=(160, 400, 200), output_dim=10):
    """PyTorch nn.Linear-style init, stored as (in, out) so y = x @ W + b."""
    dims = list(neurons) + [output_dim]
    params = []
    for i in range(len(dims) - 1):
        fan_in, fan_out = dims[i], dims[i + 1]
        key, kw, kb = jax.random.split(key, 3)
        bound = 1.0 / jnp.sqrt(fan_in)
        w = jax.random.uniform(kw, (fan_in, fan_out), jnp.float32, -bound, bound)
        b = jax.random.uniform(kb, (1, fan_out), jnp.float32, -bound, bound)
        params += [w, b]
    return tuple(params)


def pad_params(params):
    """Zero-pad HIDDEN feature dims to multiples of 128; weights -> bf16.

    Padded hidden columns have zero weight & bias, so sigmoid(0)=0.5 there is
    multiplied by zero-padded rows of the next weight -> exact no-op.  The
    final output dim stays unpadded (10) so the kernel writes it directly.
    """
    w1, b1, w2, b2, w3, b3 = params
    h1p = _round_up(w1.shape[1], LANE)   # 400 -> 512
    h2p = _round_up(w2.shape[1], LANE)   # 200 -> 256

    w1p = jnp.pad(w1, ((0, 0), (0, h1p - w1.shape[1]))).astype(jnp.bfloat16)
    b1p = jnp.pad(b1, ((0, 0), (0, h1p - b1.shape[1])))
    w2p = jnp.pad(w2, ((0, h1p - w2.shape[0]), (0, h2p - w2.shape[1]))).astype(jnp.bfloat16)
    b2p = jnp.pad(b2, ((0, 0), (0, h2p - b2.shape[1])))
    w3p = jnp.pad(w3, ((0, h2p - w3.shape[0]), (0, 0))).astype(jnp.bfloat16)
    b3p = b3
    return (w1p, b1p, w2p, b2p, w3p, b3p)


def dnn_reference(x, params):
    """Pure-JAX f32 reference for correctness check."""
    w1, b1, w2, b2, w3, b3 = params
    h1 = jax.nn.sigmoid(x @ w1 + b1)
    h2 = jax.nn.sigmoid(h1 @ w2 + b2)
    return h2 @ w3 + b3


# ----------------------------------------------------------------------------- main
if __name__ == "__main__":
    key = jax.random.PRNGKey(0)
    key, kx = jax.random.split(key)

    B = 8                        # small batch for the check
    neurons = (160, 400, 200)    # module defaults
    output_dim = 10

    x = jax.random.normal(kx, (B, neurons[0]), jnp.float32)
    params = init_params(key, neurons, output_dim)
    padded = pad_params(params)

    fwd = jax.jit(functools.partial(dnn_forward, output_dim=output_dim))
    out = fwd(x, padded)
    out = jax.block_until_ready(out)

    ref = dnn_reference(x, params)
    assert out.shape == (B, output_dim)
    # bf16 matmul weights + (possibly bf16) exp + approx-reciprocal vs f32 reference.
    assert jnp.allclose(out, ref, atol=2.5e-2, rtol=2.5e-2), float(jnp.max(jnp.abs(out - ref)))

    print("KERNEL_OK")
</pallas_src>

<mosaic_0001>
module attributes {stable_mosaic.version = 11 : i64} {
  func.func @dnn_kernel(%arg0: i32, %arg1: memref<8x160xf32, #tpu.memory_space<vmem>>, %arg2: memref<160x512xbf16, #tpu.memory_space<vmem>>, %arg3: memref<1x512xf32, #tpu.memory_space<vmem>>, %arg4: memref<512x256xbf16, #tpu.memory_space<vmem>>, %arg5: memref<1x256xf32, #tpu.memory_space<vmem>>, %arg6: memref<256x10xbf16, #tpu.memory_space<vmem>>, %arg7: memref<1x10xf32, #tpu.memory_space<vmem>>, %arg8: memref<8x10xf32, #tpu.memory_space<vmem>>) attributes {dimension_semantics = [#tpu.dimension_semantics<parallel>], iteration_bounds = array<i64: 1>, scalar_prefetch = 0 : i64, scratch_operands = 0 : i64, tpu.core_type = #tpu.core_type<tc>, window_params = [{transform_indices = @transform_0, window_bounds = array<i64: 8, 160>}, {pipeline_mode = #tpu.pipeline_mode<synchronous>, transform_indices = @transform_1, window_bounds = array<i64: 160, 512>}, {pipeline_mode = #tpu.pipeline_mode<synchronous>, transform_indices = @transform_2, window_bounds = array<i64: 1, 512>}, {pipeline_mode = #tpu.pipeline_mode<synchronous>, transform_indices = @transform_3, window_bounds = array<i64: 512, 256>}, {pipeline_mode = #tpu.pipeline_mode<synchronous>, transform_indices = @transform_4, window_bounds = array<i64: 1, 256>}, {pipeline_mode = #tpu.pipeline_mode<synchronous>, transform_indices = @transform_5, window_bounds = array<i64: 256, 10>}, {pipeline_mode = #tpu.pipeline_mode<synchronous>, transform_indices = @transform_6, window_bounds = array<i64: 1, 10>}, {transform_indices = @transform_7, window_bounds = array<i64: 8, 10>}]} {
    %c0 = arith.constant 0 : index
    %c0_0 = arith.constant 0 : index
    %0 = vector.load %arg1[%c0, %c0_0] : memref<8x160xf32, #tpu.memory_space<vmem>>, vector<8x160xf32>
    %1 = arith.truncf %0 : vector<8x160xf32> to vector<8x160xbf16>
    %c0_1 = arith.constant 0 : index
    %c0_2 = arith.constant 0 : index
    %2 = vector.load %arg2[%c0_1, %c0_2] : memref<160x512xbf16, #tpu.memory_space<vmem>>, vector<160x512xbf16>
    %cst = arith.constant dense<0.000000e+00> : vector<8x512xf32>
    %3 = tpu.matmul %1, %2, %cst {dimension_numbers = #tpu.dot_dimension_numbers<[1], [0], [0], [1], [0, 0, 1, 1], [], []>} : vector<8x160xbf16>, vector<160x512xbf16>, vector<8x512xf32> -> vector<8x512xf32>
    %c0_3 = arith.constant 0 : index
    %c0_4 = arith.constant 0 : index
    %4 = vector.load %arg3[%c0_3, %c0_4] : memref<1x512xf32, #tpu.memory_space<vmem>>, vector<1x512xf32>
    %5 = vector.broadcast %4 : vector<1x512xf32> to vector<8x512xf32>
    %6 = arith.addf %3, %5 : vector<8x512xf32>
    %7 = arith.truncf %6 : vector<8x512xf32> to vector<8x512xbf16>
    %cst_5 = arith.constant 0.000000e+00 : bf16
    %8 = vector.broadcast %cst_5 : bf16 to vector<8x512xbf16>
    %9 = arith.subf %8, %7 : vector<8x512xbf16>
    %10 = math.exp %9 : vector<8x512xbf16>
    %11 = arith.extf %10 : vector<8x512xbf16> to vector<8x512xf32>
    %cst_6 = arith.constant 1.000000e+00 : f32
    %12 = vector.broadcast %cst_6 : f32 to vector<8x512xf32>
    %13 = arith.addf %12, %11 : vector<8x512xf32>
    %14 = tpu.reciprocal %13 {approx = true} : vector<8x512xf32> -> vector<8x512xf32>
    %15 = arith.truncf %14 : vector<8x512xf32> to vector<8x512xbf16>
    %c0_7 = arith.constant 0 : index
    %c0_8 = arith.constant 0 : index
    %16 = vector.load %arg4[%c0_7, %c0_8] : memref<512x256xbf16, #tpu.memory_space<vmem>>, vector<512x256xbf16>
    %cst_9 = arith.constant dense<0.000000e+00> : vector<8x256xf32>
    %17 = tpu.matmul %15, %16, %cst_9 {dimension_numbers = #tpu.dot_dimension_numbers<[1], [0], [0], [1], [0, 0, 1, 1], [], []>} : vector<8x512xbf16>, vector<512x256xbf16>, vector<8x256xf32> -> vector<8x256xf32>
    %c0_10 = arith.constant 0 : index
    %c0_11 = arith.constant 0 : index
    %18 = vector.load %arg5[%c0_10, %c0_11] : memref<1x256xf32, #tpu.memory_space<vmem>>, vector<1x256xf32>
    %19 = vector.broadcast %18 : vector<1x256xf32> to vector<8x256xf32>
    %20 = arith.addf %17, %19 : vector<8x256xf32>
    %21 = arith.truncf %20 : vector<8x256xf32> to vector<8x256xbf16>
    %cst_12 = arith.constant 0.000000e+00 : bf16
    %22 = vector.broadcast %cst_12 : bf16 to vector<8x256xbf16>
    %23 = arith.subf %22, %21 : vector<8x256xbf16>
    %24 = math.exp %23 : vector<8x256xbf16>
    %25 = arith.extf %24 : vector<8x256xbf16> to vector<8x256xf32>
    %cst_13 = arith.constant 1.000000e+00 : f32
    %26 = vector.broadcast %cst_13 : f32 to vector<8x256xf32>
    %27 = arith.addf %26, %25 : vector<8x256xf32>
    %28 = tpu.reciprocal %27 {approx = true} : vector<8x256xf32> -> vector<8x256xf32>
    %29 = arith.truncf %28 : vector<8x256xf32> to vector<8x256xbf16>
    %c0_14 = arith.constant 0 : index
    %c0_15 = arith.constant 0 : index
    %30 = vector.load %arg6[%c0_14, %c0_15] : memref<256x10xbf16, #tpu.memory_space<vmem>>, vector<256x10xbf16>
    %cst_16 = arith.constant dense<0.000000e+00> : vector<8x10xf32>
    %31 = tpu.matmul %29, %30, %cst_16 {dimension_numbers = #tpu.dot_dimension_numbers<[1], [0], [0], [1], [0, 0, 1, 1], [], []>} : vector<8x256xbf16>, vector<256x10xbf16>, vector<8x10xf32> -> vector<8x10xf32>
    %c0_17 = arith.constant 0 : index
    %c0_18 = arith.constant 0 : index
    %32 = vector.load %arg7[%c0_17, %c0_18] : memref<1x10xf32, #tpu.memory_space<vmem>>, vector<1x10xf32>
    %33 = vector.broadcast %32 : vector<1x10xf32> to vector<8x10xf32>
    %34 = arith.addf %31, %33 : vector<8x10xf32>
    %c0_19 = arith.constant 0 : index
    %c0_20 = arith.constant 0 : index
    %35 = vector.load %arg8[%c0_19, %c0_20] : memref<8x10xf32, #tpu.memory_space<vmem>>, vector<8x10xf32>
    tpu.vector_store %arg8[%c0_19, %c0_20], %34 {strides = array<i32>} : memref<8x10xf32, #tpu.memory_space<vmem>>, vector<8x10xf32>,
    return
  }
  func.func @transform_0(%arg0: i32) -> (i32, i32) {
    %c0_i32 = arith.constant 0 : i32
    %c0_i32_0 = arith.constant 0 : i32
    return %arg0, %c0_i32 : i32, i32
  }
  func.func @transform_1(%arg0: i32) -> (i32, i32) {
    %c0_i32 = arith.constant 0 : i32
    %c0_i32_0 = arith.constant 0 : i32
    %c0_i32_1 = arith.constant 0 : i32
    return %c0_i32, %c0_i32_0 : i32, i32
  }
  func.func @transform_2(%arg0: i32) -> (i32, i32) {
    %c0_i32 = arith.constant 0 : i32
    %c0_i32_0 = arith.constant 0 : i32
    %c0_i32_1 = arith.constant 0 : i32
    return %c0_i32, %c0_i32_0 : i32, i32
  }
  func.func @transform_3(%arg0: i32) -> (i32, i32) {
    %c0_i32 = arith.constant 0 : i32
    %c0_i32_0 = arith.constant 0 : i32
    %c0_i32_1 = arith.constant 0 : i32
    return %c0_i32, %c0_i32_0 : i32, i32
  }
  func.func @transform_4(%arg0: i32) -> (i32, i32) {
    %c0_i32 = arith.constant 0 : i32
    %c0_i32_0 = arith.constant 0 : i32
    %c0_i32_1 = arith.constant 0 : i32
    return %c0_i32, %c0_i32_0 : i32, i32
  }
  func.func @transform_5(%arg0: i32) -> (i32, i32) {
    %c0_i32 = arith.constant 0 : i32
    %c0_i32_0 = arith.constant 0 : i32
    %c0_i32_1 = arith.constant 0 : i32
    return %c0_i32, %c0_i32_0 : i32, i32
  }
  func.func @transform_6(%arg0: i32) -> (i32, i32) {
    %c0_i32 = arith.constant 0 : i32
    %c0_i32_0 = arith.constant 0 : i32
    %c0_i32_1 = arith.constant 0 : i32
    return %c0_i32, %c0_i32_0 : i32, i32
  }
  func.func @transform_7(%arg0: i32) -> (i32, i32) {
    %c0_i32 = arith.constant 0 : i32
    %c0_i32_0 = arith.constant 0 : i32
    return %arg0, %c0_i32 : i32, i32
  }
}

</mosaic_0001>

<llo_original>
// kernel: dnn_forward.1
$region0: #{dnn_forward.1}
  #allocation0 [shape = 'u32[]', space=smem, size = 0x4, offset = 0x4, fixed_abs, tag = 'smem constant byte address 0x4 - core index']
  #allocation1 [shape = 'u32[144,128]{1,0:T(1,128)}', space=vmem, size = 0x12000, scoped, tag = 'internal scratch']
  %s0 = inlined_call_operand.vmem [shape: f32[8,160], index: 0, kind: input, shape index: {}]
  %s1 = inlined_call_operand.hbm [shape: bf16[160,512], index: 1, kind: input, shape index: {}]
  %s2 = inlined_call_operand.vmem [shape: f32[1,512], index: 2, kind: input, shape index: {}]
  %s3 = inlined_call_operand.hbm [shape: bf16[512,256], index: 3, kind: input, shape index: {}]
  %s4 = inlined_call_operand.vmem [shape: f32[1,256], index: 4, kind: input, shape index: {}]
  %s5 = inlined_call_operand.vmem [shape: bf16[256,10], index: 5, kind: input, shape index: {}]
  %s6 = inlined_call_operand.vmem [shape: f32[1,10], index: 6, kind: input, shape index: {}]
  %s7 = inlined_call_operand.hbm [shape: f32[8,10], index: 7, kind: output, shape index: {}]
  %s8 = sld [smem:[#allocation0]]
  $region46: #{dnn_forward.1} parent=0
    _
  %s10 = ssub.s32 1, %s8
  %s11 = scalar_select 0, %s10, %s8
  $region1: #{dnn_forward.1} parent=0
    #allocation2 [shape = 'u8[163840]{0}', space=vmem, size = 0x28000, scoped, tag = 'input window, operand 1, single buffered']
    #allocation3 [shape = 's32[1]{0}', space=sflag, size = 0x4, scoped, tag = 'scoped memory for dnn_forward.1']
    #allocation4 [shape = 's32[1]{0}', space=sflag, size = 0x4, scoped, tag = 'scoped memory for dnn_forward.1']
    #allocation5 [shape = 'u8[262144]{0}', space=vmem, size = 0x40000, scoped, tag = 'input window, operand 3, single buffered']
    #allocation6 [shape = 's32[1]{0}', space=sflag, size = 0x4, scoped, tag = 'scoped memory for dnn_forward.1']
    #allocation7 [shape = 'u8[4096]{0}', space=vmem, size = 0x1000, scoped, tag = 'output window, operand 0, single buffered']
    %12 = vsyncpa [#allocation3], 0
    %13 = vsyncpa [#allocation6], 0
    %14 = vsyncpa [#allocation4], 0
    // Predicated region
    $region2: #{dnn_forward.1} parent=1 // pred_check
      _
    $region3: #{dnn_forward.1} parent=1 // pred_check_branch
      %16 = sbr.rel (0) target = $region5
    $region4: #{dnn_forward.1} parent=1 // pred_region
      _
    $region5: #{dnn_forward.1} parent=1 // pred_fallthru
      _
    // Predicated region
    $region6: #{dnn_forward.1} parent=1 // pred_check
      _
    $region7: #{dnn_forward.1} parent=1 // pred_check_branch
      %18 = sbr.rel (0) target = $region9
    $region8: #{dnn_forward.1} parent=1 // pred_region
      %s20 = ssub.s32 5120, 5120
      %21 = vsyncadd [#allocation3], %s20
      %s22 = sshll.u32 [#allocation2], 4
      %s23 = int_to_ptr.vmem [resolvable:$true] %s22
      %28 = dma.hbm_to_vmem [thread:$0]  %s1, 5120, %s23, [#allocation3], 256, 256, 16
    $region9: #{dnn_forward.1} parent=1 // pred_fallthru
      _
    // Predicated region
    $region10: #{dnn_forward.1} parent=1 // pred_check
      _
    $region11: #{dnn_forward.1} parent=1 // pred_check_branch
      %30 = sbr.rel (0) target = $region13
    $region12: #{dnn_forward.1} parent=1 // pred_region
      _
    $region13: #{dnn_forward.1} parent=1 // pred_fallthru
      _
    // Predicated region
    $region14: #{dnn_forward.1} parent=1 // pred_check
      _
    $region15: #{dnn_forward.1} parent=1 // pred_check_branch
      %32 = sbr.rel (0) target = $region17
    $region16: #{dnn_forward.1} parent=1 // pred_region
      %s34 = ssub.s32 8192, 8192
      %35 = vsyncadd [#allocation6], %s34
      %s36 = sshll.u32 [#allocation5], 4
      %s37 = int_to_ptr.vmem [resolvable:$true] %s36
      %42 = dma.hbm_to_vmem [thread:$0]  %s3, 8192, %s37, [#allocation6], 128, 128, 8
    $region17: #{dnn_forward.1} parent=1 // pred_fallthru
      _
    // Predicated region
    $region18: #{dnn_forward.1} parent=1 // pred_check
      _
    $region19: #{dnn_forward.1} parent=1 // pred_check_branch
      %44 = sbr.rel (0) target = $region21
    $region20: #{dnn_forward.1} parent=1 // pred_region
      _
    $region21: #{dnn_forward.1} parent=1 // pred_fallthru
      _
    // Predicated region
    $region22: #{dnn_forward.1} parent=1 // pred_check
      _
    $region23: #{dnn_forward.1} parent=1 // pred_check_branch
      %46 = sbr.rel (0) target = $region25
    $region24: #{dnn_forward.1} parent=1 // pred_region
      _
    $region25: #{dnn_forward.1} parent=1 // pred_fallthru
      _
    // Predicated region
    $region26: #{dnn_forward.1} parent=1 // pred_check
      _
    $region27: #{dnn_forward.1} parent=1 // pred_check_branch
      %48 = sbr.rel (0) target = $region29
    $region28: #{dnn_forward.1} parent=1 // pred_region
      _
    $region29: #{dnn_forward.1} parent=1 // pred_fallthru
      _
    // Predicated region
    $region30: #{dnn_forward.1} parent=1 // pred_check
      _
    $region31: #{dnn_forward.1} parent=1 // pred_check_branch
      %50 = sbr.rel (0) target = $region33
    $region32: #{dnn_forward.1} parent=1 // pred_region
      %51 = dma.done [#allocation3], 5120
    $region33: #{dnn_forward.1} parent=1 // pred_fallthru
      _
    // Predicated region
    $region34: #{dnn_forward.1} parent=1 // pred_check
      _
    $region35: #{dnn_forward.1} parent=1 // pred_check_branch
      %53 = sbr.rel (0) target = $region37
    $region36: #{dnn_forward.1} parent=1 // pred_region
      %54 = dma.done [#allocation6], 8192
    $region37: #{dnn_forward.1} parent=1 // pred_fallthru
      _
    %v56 = vld [vmem:[%s0] sm:$0xff]
    %v57 = vld [vmem:[%s0 + $0x8] sm:$0xff]
    %v58 = vpack.c.bf16 %v56, %v56
    %v59 = vpack.c.bf16 %v57, %v57
    %v60 = vld [vmem:[#allocation2] sm:$0xff]
    %v61 = vld [vmem:[#allocation2 + $0x8] sm:$0xff]
    %v62 = vld [vmem:[#allocation2 + $0x10] sm:$0xff]
    %v63 = vld [vmem:[#allocation2 + $0x18] sm:$0xff]
    %v64 = vld [vmem:[#allocation2 + $0x20] sm:$0xff]
    %v65 = vld [vmem:[#allocation2 + $0x28] sm:$0xff]
    %v66 = vld [vmem:[#allocation2 + $0x30] sm:$0xff]
    %v67 = vld [vmem:[#allocation2 + $0x38] sm:$0xff]
    %v68 = vld [vmem:[#allocation2 + $0x40] sm:$0xff]
    %v69 = vld [vmem:[#allocation2 + $0x48] sm:$0xff]
    %v70 = vld [vmem:[#allocation2 + $0x50] sm:$0xff]
    %v71 = vld [vmem:[#allocation2 + $0x58] sm:$0xff]
    %v72 = vld [vmem:[#allocation2 + $0x60] sm:$0xff]
    %v73 = vld [vmem:[#allocation2 + $0x68] sm:$0xff]
    %v74 = vld [vmem:[#allocation2 + $0x70] sm:$0xff]
    %v75 = vld [vmem:[#allocation2 + $0x78] sm:$0xff]
    %v76 = vld [vmem:[#allocation2 + $0x80] sm:$0xff]
    %v77 = vld [vmem:[#allocation2 + $0x88] sm:$0xff]
    %v78 = vld [vmem:[#allocation2 + $0x90] sm:$0xff]
    %v79 = vld [vmem:[#allocation2 + $0x98] sm:$0xff]
    %v80 = vld [vmem:[#allocation2 + $0xa0] sm:$0xff]
    %v81 = vld [vmem:[#allocation2 + $0xa8] sm:$0xff]
    %v82 = vld [vmem:[#allocation2 + $0xb0] sm:$0xff]
    %v83 = vld [vmem:[#allocation2 + $0xb8] sm:$0xff]
    %v84 = vld [vmem:[#allocation2 + $0xc0] sm:$0xff]
    %v85 = vld [vmem:[#allocation2 + $0xc8] sm:$0xff]
    %v86 = vld [vmem:[#allocation2 + $0xd0] sm:$0xff]
    %v87 = vld [vmem:[#allocation2 + $0xd8] sm:$0xff]
    %v88 = vld [vmem:[#allocation2 + $0xe0] sm:$0xff]
    %v89 = vld [vmem:[#allocation2 + $0xe8] sm:$0xff]
    %v90 = vld [vmem:[#allocation2 + $0xf0] sm:$0xff]
    %v91 = vld [vmem:[#allocation2 + $0xf8] sm:$0xff]
    %v92 = vld [vmem:[#allocation2 + $0x100] sm:$0xff]
    %v93 = vld [vmem:[#allocation2 + $0x108] sm:$0xff]
    %v94 = vld [vmem:[#allocation2 + $0x110] sm:$0xff]
    %v95 = vld [vmem:[#allocation2 + $0x118] sm:$0xff]
    %v96 = vld [vmem:[#allocation2 + $0x120] sm:$0xff]
    %v97 = vld [vmem:[#allocation2 + $0x128] sm:$0xff]
    %v98 = vld [vmem:[#allocation2 + $0x130] sm:$0xff]
    %v99 = vld [vmem:[#allocation2 + $0x138] sm:$0xff]
    %v100 = vld [vmem:[%s2] sm:$0xf]
    %v102 = vlaneseq
    %v103 = vshrl.u32 %v102, 7
    %v104 = vsub.s32 0, %v103
    %v105 = vrot.slane %v100, %v104
    %v106 = vlaneseq
    %v107 = vshrl.u32 %v106, 7
    %v108 = vsub.s32 1, %v107
    %v109 = vrot.slane %v100, %v108
    %v110 = vlaneseq
    %v111 = vshrl.u32 %v110, 7
    %v112 = vsub.s32 2, %v111
    %v113 = vrot.slane %v100, %v112
    %v114 = vlaneseq
    %v115 = vshrl.u32 %v114, 7
    %v116 = vsub.s32 3, %v115
    %v117 = vrot.slane %v100, %v116
    %v162 = vunpack.c.l.b16 %v60
    %v163 = vunpack.c.h.b16 %v60
    %v164 = vunpack.c.l.b16 %v61
    %v165 = vunpack.c.h.b16 %v61
    %v166 = vunpack.c.l.b16 %v62
    %v167 = vunpack.c.h.b16 %v62
    %v168 = vunpack.c.l.b16 %v63
    %v169 = vunpack.c.h.b16 %v63
    %v170 = vunpack.c.l.b16 %v64
    %v171 = vunpack.c.h.b16 %v64
    %v172 = vunpack.c.l.b16 %v65
    %v173 = vunpack.c.h.b16 %v65
    %v174 = vunpack.c.l.b16 %v66
    %v175 = vunpack.c.h.b16 %v66
    %v176 = vunpack.c.l.b16 %v67
    %v177 = vunpack.c.h.b16 %v67
    %v178 = vunpack.c.l.b16 %v68
    %v179 = vunpack.c.h.b16 %v68
    %v180 = vunpack.c.l.b16 %v69
    %v181 = vunpack.c.h.b16 %v69
    %v182 = vunpack.c.l.b16 %v70
    %v183 = vunpack.c.h.b16 %v70
    %v184 = vunpack.c.l.b16 %v71
    %v185 = vunpack.c.h.b16 %v71
    %v186 = vunpack.c.l.b16 %v72
    %v187 = vunpack.c.h.b16 %v72
    %v188 = vunpack.c.l.b16 %v73
    %v189 = vunpack.c.h.b16 %v73
    %v190 = vunpack.c.l.b16 %v74
    %v191 = vunpack.c.h.b16 %v74
    %v192 = vunpack.c.l.b16 %v75
    %v193 = vunpack.c.h.b16 %v75
    %v194 = vunpack.c.l.b16 %v76
    %v195 = vunpack.c.h.b16 %v76
    %v196 = vunpack.c.l.b16 %v77
    %v197 = vunpack.c.h.b16 %v77
    %v198 = vunpack.c.l.b16 %v78
    %v199 = vunpack.c.h.b16 %v78
    %v200 = vunpack.c.l.b16 %v79
    %v201 = vunpack.c.h.b16 %v79
    %v202 = vunpack.c.l.b16 %v80
    %v203 = vunpack.c.h.b16 %v80
    %v204 = vunpack.c.l.b16 %v81
    %v205 = vunpack.c.h.b16 %v81
    %v206 = vunpack.c.l.b16 %v82
    %v207 = vunpack.c.h.b16 %v82
    %v208 = vunpack.c.l.b16 %v83
    %v209 = vunpack.c.h.b16 %v83
    %v210 = vunpack.c.l.b16 %v84
    %v211 = vunpack.c.h.b16 %v84
    %v212 = vunpack.c.l.b16 %v85
    %v213 = vunpack.c.h.b16 %v85
    %v214 = vunpack.c.l.b16 %v86
    %v215 = vunpack.c.h.b16 %v86
    %v216 = vunpack.c.l.b16 %v87
    %v217 = vunpack.c.h.b16 %v87
    %v218 = vunpack.c.l.b16 %v88
    %v219 = vunpack.c.h.b16 %v88
    %v220 = vunpack.c.l.b16 %v89
    %v221 = vunpack.c.h.b16 %v89
    %v222 = vunpack.c.l.b16 %v90
    %v223 = vunpack.c.h.b16 %v90
    %v224 = vunpack.c.l.b16 %v91
    %v225 = vunpack.c.h.b16 %v91
    %v226 = vunpack.c.l.b16 %v92
    %v227 = vunpack.c.h.b16 %v92
    %v228 = vunpack.c.l.b16 %v93
    %v229 = vunpack.c.h.b16 %v93
    %v230 = vunpack.c.l.b16 %v94
    %v231 = vunpack.c.h.b16 %v94
    %v232 = vunpack.c.l.b16 %v95
    %v233 = vunpack.c.h.b16 %v95
    %v234 = vunpack.c.l.b16 %v96
    %v235 = vunpack.c.h.b16 %v96
    %v236 = vunpack.c.l.b16 %v97
    %v237 = vunpack.c.h.b16 %v97
    %v238 = vunpack.c.l.b16 %v98
    %v239 = vunpack.c.h.b16 %v98
    %v240 = vunpack.c.l.b16 %v99
    %v241 = vunpack.c.h.b16 %v99
    %v242 = vpack.c.b16 %v166, %v162
    %v243 = vpack.c.b16 %v167, %v163
    %v244 = vpack.c.b16 %v168, %v164
    %v245 = vpack.c.b16 %v169, %v165
    %v246 = vpack.c.b16 %v174, %v170
    %v247 = vpack.c.b16 %v175, %v171
    %v248 = vpack.c.b16 %v176, %v172
    %v249 = vpack.c.b16 %v177, %v173
    %v250 = vpack.c.b16 %v182, %v178
    %v251 = vpack.c.b16 %v183, %v179
    %v252 = vpack.c.b16 %v184, %v180
    %v253 = vpack.c.b16 %v185, %v181
    %v254 = vpack.c.b16 %v190, %v186
    %v255 = vpack.c.b16 %v191, %v187
    %v256 = vpack.c.b16 %v192, %v188
    %v257 = vpack.c.b16 %v193, %v189
    %v258 = vpack.c.b16 %v198, %v194
    %v259 = vpack.c.b16 %v199, %v195
    %v260 = vpack.c.b16 %v200, %v196
    %v261 = vpack.c.b16 %v201, %v197
    %v262 = vpack.c.b16 %v206, %v202
    %v263 = vpack.c.b16 %v207, %v203
    %v264 = vpack.c.b16 %v208, %v204
    %v265 = vpack.c.b16 %v209, %v205
    %v266 = vpack.c.b16 %v214, %v210
    %v267 = vpack.c.b16 %v215, %v211
    %v268 = vpack.c.b16 %v216, %v212
    %v269 = vpack.c.b16 %v217, %v213
    %v270 = vpack.c.b16 %v222, %v218
    %v271 = vpack.c.b16 %v223, %v219
    %v272 = vpack.c.b16 %v224, %v220
    %v273 = vpack.c.b16 %v225, %v221
    %v274 = vpack.c.b16 %v230, %v226
    %v275 = vpack.c.b16 %v231, %v227
    %v276 = vpack.c.b16 %v232, %v228
    %v277 = vpack.c.b16 %v233, %v229
    %v278 = vpack.c.b16 %v238, %v234
    %v279 = vpack.c.b16 %v239, %v235
    %v280 = vpack.c.b16 %v240, %v236
    %v281 = vpack.c.b16 %v241, %v237
    %vm322 = vcmask 261120
    %v324 = vsel %vm322, %v59, 0
    %326 = vmatprep.subr.bf16.mxu0 %v243
    %327 = vmatpush1.bf16.msra.mxu0 %v242
    %328 = vmatprep.subr.bf16.mxu0 %v247
    %329 = vmatpush1.bf16.msra.mxu0 %v246
    %330 = vmatprep.subr.bf16.mxu0 %v251
    %331 = vmatpush1.bf16.msra.mxu0 %v250
    %332 = vmatprep.subr.bf16.mxu0 %v255
    %333 = vmatpush1.bf16.msra.mxu0 %v254
    %334 = vmatprep.subr.bf16.mxu0 %v259
    %335 = vmatpush1.bf16.msra.mxu0 %v258
    %336 = vmatprep.subr.bf16.mxu0 %v263
    %337 = vmatpush1.bf16.msra.mxu0 %v262
    %338 = vmatprep.subr.bf16.mxu0 %v267
    %339 = vmatpush1.bf16.msra.mxu0 %v266
    %340 = vmatprep.subr.bf16.mxu0 %v271
    %341 = vmatpush1.bf16.msra.mxu0 %v270
    %342 = vmatprep.subr.bf16.mxu0 %v275
    %343 = vmatpush1.bf16.msra.mxu0 %v274
    %344 = vmatprep.subr.bf16.mxu0 %v279
    %345 = vmatpush1.bf16.msra.mxu0 %v278
    %346 = vmatprep.subr.bf16.mxu0 0
    %347 = vmatpush1.bf16.msra.mxu0 0
    %348 = vmatprep.subr.bf16.mxu0 0
    %349 = vmatpush1.bf16.msra.mxu0 0
    %350 = vmatprep.subr.bf16.mxu0 0
    %351 = vmatpush1.bf16.msra.mxu0 0
    %352 = vmatprep.subr.bf16.mxu0 0
    %353 = vmatpush1.bf16.msra.mxu0 0
    %354 = vmatprep.subr.bf16.mxu0 0
    %355 = vmatpush1.bf16.msra.mxu0 0
    %356 = vmatprep.subr.bf16.mxu0 0
    %357 = vmatpush1.bf16.msra.mxu0 0
    %358 = vmatprep.mubr.bf16.mxu0 %v324
    %359 = vmatmul.mubr.bf16.gmra.mrb[0].mxu0 %v58
    %v360 = vpop.f32.mrb[0].mxu0
    %v361 = vadd.f32 %v105, %v360
    %v362 = vpop.f32.mrb[0].mxu0
    %v363 = vadd.f32 %v109, %v362
    %v364 = vpop.f32.mrb[0].mxu0
    %v365 = vpop.f32.mrb[0].mxu0
    %366 = vdwg.mxu0
    %367 = vmatprep.subr.bf16.mxu0 %v245
    %368 = vmatpush1.bf16.msra.mxu0 %v244
    %369 = vmatprep.subr.bf16.mxu0 %v249
    %370 = vmatpush1.bf16.msra.mxu0 %v248
    %371 = vmatprep.subr.bf16.mxu0 %v253
    %372 = vmatpush1.bf16.msra.mxu0 %v252
    %373 = vmatprep.subr.bf16.mxu0 %v257
    %374 = vmatpush1.bf16.msra.mxu0 %v256
    %375 = vmatprep.subr.bf16.mxu0 %v261
    %376 = vmatpush1.bf16.msra.mxu0 %v260
    %377 = vmatprep.subr.bf16.mxu0 %v265
    %378 = vmatpush1.bf16.msra.mxu0 %v264
    %379 = vmatprep.subr.bf16.mxu0 %v269
    %380 = vmatpush1.bf16.msra.mxu0 %v268
    %381 = vmatprep.subr.bf16.mxu0 %v273
    %382 = vmatpush1.bf16.msra.mxu0 %v272
    %383 = vmatprep.subr.bf16.mxu0 %v277
    %384 = vmatpush1.bf16.msra.mxu0 %v276
    %385 = vmatprep.subr.bf16.mxu0 %v281
    %386 = vmatpush1.bf16.msra.mxu0 %v280
    %387 = vmatprep.subr.bf16.mxu0 0
    %388 = vmatpush1.bf16.msra.mxu0 0
    %389 = vmatprep.subr.bf16.mxu0 0
    %390 = vmatpush1.bf16.msra.mxu0 0
    %391 = vmatprep.subr.bf16.mxu0 0
    %392 = vmatpush1.bf16.msra.mxu0 0
    %393 = vmatprep.subr.bf16.mxu0 0
    %394 = vmatpush1.bf16.msra.mxu0 0
    %395 = vmatprep.subr.bf16.mxu0 0
    %396 = vmatpush1.bf16.msra.mxu0 0
    %397 = vmatprep.subr.bf16.mxu0 0
    %398 = vmatpush1.bf16.msra.mxu0 0
    %399 = vmatprep.mubr.bf16.mxu0 %v324
    %400 = vmatmul.mubr.bf16.gmra.mrb[0].mxu0 %v58
    %v401 = vpop.f32.mrb[0].mxu0
    %v402 = vadd.f32 %v113, %v401
    %v403 = vpop.f32.mrb[0].mxu0
    %v404 = vadd.f32 %v117, %v403
    %v405 = vpop.f32.mrb[0].mxu0
    %v406 = vpop.f32.mrb[0].mxu0
    %407 = vdwg.mxu0
    %v408 = vpack.c.bf16 %v361, %v361
    %v409 = vpack.c.bf16 %v363, %v363
    %v410 = vpack.c.bf16 %v402, %v402
    %v411 = vpack.c.bf16 %v404, %v404
    %v412 = vsub.bf16 0, %v408
    %v413 = vsub.bf16 0, %v409
    %v414 = vsub.bf16 0, %v410
    %v415 = vsub.bf16 0, %v411
    %v417 = vmul.bf16 %v412, 1069105081
    %v418 = vpow.bf16.pop %v417
    %v420 = vmul.bf16 %v413, 1069105081
    %v421 = vpow.bf16.pop %v420
    %v423 = vmul.bf16 %v414, 1069105081
    %v424 = vpow.bf16.pop %v423
    %v426 = vmul.bf16 %v415, 1069105081
    %v427 = vpow.bf16.pop %v426
    %v428 = vunpack.c.l.bf16 %v418
    %v429 = vunpack.c.l.bf16 %v421
    %v430 = vunpack.c.l.bf16 %v424
    %v431 = vunpack.c.l.bf16 %v427
    %v432 = vadd.f32 %v428, 1.0
    %v433 = vadd.f32 %v429, 1.0
    %v434 = vadd.f32 %v430, 1.0
    %v435 = vadd.f32 %v431, 1.0
    %v436 = vrcp.pop %v432
    %v437 = vrcp.pop %v433
    %v438 = vrcp.pop %v434
    %v439 = vrcp.pop %v435
    %v440 = vpack.c.bf16 %v436, %v436
    %v441 = vpack.c.bf16 %v437, %v437
    %v442 = vpack.c.bf16 %v438, %v438
    %v443 = vpack.c.bf16 %v439, %v439
    %v444 = vld [vmem:[#allocation5] sm:$0xff]
    %v445 = vld [vmem:[#allocation5 + $0x8] sm:$0xff]
    %v446 = vld [vmem:[#allocation5 + $0x10] sm:$0xff]
    %v447 = vld [vmem:[#allocation5 + $0x18] sm:$0xff]
    %v448 = vld [vmem:[#allocation5 + $0x20] sm:$0xff]
    %v449 = vld [vmem:[#allocation5 + $0x28] sm:$0xff]
    %v450 = vld [vmem:[#allocation5 + $0x30] sm:$0xff]
    %v451 = vld [vmem:[#allocation5 + $0x38] sm:$0xff]
    %v452 = vld [vmem:[#allocation5 + $0x40] sm:$0xff]
    %v453 = vld [vmem:[#allocation5 + $0x48] sm:$0xff]
    %v454 = vld [vmem:[#allocation5 + $0x50] sm:$0xff]
    %v455 = vld [vmem:[#allocation5 + $0x58] sm:$0xff]
    %v456 = vld [vmem:[#allocation5 + $0x60] sm:$0xff]
    %v457 = vld [vmem:[#allocation5 + $0x68] sm:$0xff]
    %v458 = vld [vmem:[#allocation5 + $0x70] sm:$0xff]
    %v459 = vld [vmem:[#allocation5 + $0x78] sm:$0xff]
    %v460 = vld [vmem:[#allocation5 + $0x80] sm:$0xff]
    %v461 = vld [vmem:[#allocation5 + $0x88] sm:$0xff]
    %v462 = vld [vmem:[#allocation5 + $0x90] sm:$0xff]
    %v463 = vld [vmem:[#allocation5 + $0x98] sm:$0xff]
    %v464 = vld [vmem:[#allocation5 + $0xa0] sm:$0xff]
    %v465 = vld [vmem:[#allocation5 + $0xa8] sm:$0xff]
    %v466 = vld [vmem:[#allocation5 + $0xb0] sm:$0xff]
    %v467 = vld [vmem:[#allocation5 + $0xb8] sm:$0xff]
    %v468 = vld [vmem:[#allocation5 + $0xc0] sm:$0xff]
    %v469 = vld [vmem:[#allocation5 + $0xc8] sm:$0xff]
    %v470 = vld [vmem:[#allocation5 + $0xd0] sm:$0xff]
    %v471 = vld [vmem:[#allocation5 + $0xd8] sm:$0xff]
    %v472 = vld [vmem:[#allocation5 + $0xe0] sm:$0xff]
    %v473 = vld [vmem:[#allocation5 + $0xe8] sm:$0xff]
    %v474 = vld [vmem:[#allocation5 + $0xf0] sm:$0xff]
    %v475 = vld [vmem:[#allocation5 + $0xf8] sm:$0xff]
    %v476 = vld [vmem:[#allocation5 + $0x100] sm:$0xff]
    %v477 = vld [vmem:[#allocation5 + $0x108] sm:$0xff]
    %v478 = vld [vmem:[#allocation5 + $0x110] sm:$0xff]
    %v479 = vld [vmem:[#allocation5 + $0x118] sm:$0xff]
    %v480 = vld [vmem:[#allocation5 + $0x120] sm:$0xff]
    %v481 = vld [vmem:[#allocation5 + $0x128] sm:$0xff]
    %v482 = vld [vmem:[#allocation5 + $0x130] sm:$0xff]
    %v483 = vld [vmem:[#allocation5 + $0x138] sm:$0xff]
    %v484 = vld [vmem:[#allocation5 + $0x140] sm:$0xff]
    %v485 = vld [vmem:[#allocation5 + $0x148] sm:$0xff]
    %v486 = vld [vmem:[#allocation5 + $0x150] sm:$0xff]
    %v487 = vld [vmem:[#allocation5 + $0x158] sm:$0xff]
    %v488 = vld [vmem:[#allocation5 + $0x160] sm:$0xff]
    %v489 = vld [vmem:[#allocation5 + $0x168] sm:$0xff]
    %v490 = vld [vmem:[#allocation5 + $0x170] sm:$0xff]
    %v491 = vld [vmem:[#allocation5 + $0x178] sm:$0xff]
    %v492 = vld [vmem:[#allocation5 + $0x180] sm:$0xff]
    %v493 = vld [vmem:[#allocation5 + $0x188] sm:$0xff]
    %v494 = vld [vmem:[#allocation5 + $0x190] sm:$0xff]
    %v495 = vld [vmem:[#allocation5 + $0x198] sm:$0xff]
    %v496 = vld [vmem:[#allocation5 + $0x1a0] sm:$0xff]
    %v497 = vld [vmem:[#allocation5 + $0x1a8] sm:$0xff]
    %v498 = vld [vmem:[#allocation5 + $0x1b0] sm:$0xff]
    %v499 = vld [vmem:[#allocation5 + $0x1b8] sm:$0xff]
    %v500 = vld [vmem:[#allocation5 + $0x1c0] sm:$0xff]
    %v501 = vld [vmem:[#allocation5 + $0x1c8] sm:$0xff]
    %v502 = vld [vmem:[#allocation5 + $0x1d0] sm:$0xff]
    %v503 = vld [vmem:[#allocation5 + $0x1d8] sm:$0xff]
    %v504 = vld [vmem:[#allocation5 + $0x1e0] sm:$0xff]
    %v505 = vld [vmem:[#allocation5 + $0x1e8] sm:$0xff]
    %v506 = vld [vmem:[#allocation5 + $0x1f0] sm:$0xff]
    %v507 = vld [vmem:[#allocation5 + $0x1f8] sm:$0xff]
    %v508 = vld [vmem:[%s4] sm:$0x3]
    %v510 = vlaneseq
    %v511 = vshrl.u32 %v510, 7
    %v512 = vsub.s32 0, %v511
    %v513 = vrot.slane %v508, %v512
    %v514 = vlaneseq
    %v515 = vshrl.u32 %v514, 7
    %v516 = vsub.s32 1, %v515
    %v517 = vrot.slane %v508, %v516
    %v584 = vunpack.c.l.b16 %v444
    %v585 = vunpack.c.h.b16 %v444
    %v586 = vunpack.c.l.b16 %v445
    %v587 = vunpack.c.h.b16 %v445
    %v588 = vunpack.c.l.b16 %v446
    %v589 = vunpack.c.h.b16 %v446
    %v590 = vunpack.c.l.b16 %v447
    %v591 = vunpack.c.h.b16 %v447
    %v592 = vunpack.c.l.b16 %v448
    %v593 = vunpack.c.h.b16 %v448
    %v594 = vunpack.c.l.b16 %v449
    %v595 = vunpack.c.h.b16 %v449
    %v596 = vunpack.c.l.b16 %v450
    %v597 = vunpack.c.h.b16 %v450
    %v598 = vunpack.c.l.b16 %v451
    %v599 = vunpack.c.h.b16 %v451
    %v600 = vunpack.c.l.b16 %v452
    %v601 = vunpack.c.h.b16 %v452
    %v602 = vunpack.c.l.b16 %v453
    %v603 = vunpack.c.h.b16 %v453
    %v604 = vunpack.c.l.b16 %v454
    %v605 = vunpack.c.h.b16 %v454
    %v606 = vunpack.c.l.b16 %v455
    %v607 = vunpack.c.h.b16 %v455
    %v608 = vunpack.c.l.b16 %v456
    %v609 = vunpack.c.h.b16 %v456
    %v610 = vunpack.c.l.b16 %v457
    %v611 = vunpack.c.h.b16 %v457
    %v612 = vunpack.c.l.b16 %v458
    %v613 = vunpack.c.h.b16 %v458
    %v614 = vunpack.c.l.b16 %v459
    %v615 = vunpack.c.h.b16 %v459
    %v616 = vunpack.c.l.b16 %v460
    %v617 = vunpack.c.h.b16 %v460
    %v618 = vunpack.c.l.b16 %v461
    %v619 = vunpack.c.h.b16 %v461
    %v620 = vunpack.c.l.b16 %v462
    %v621 = vunpack.c.h.b16 %v462
    %v622 = vunpack.c.l.b16 %v463
    %v623 = vunpack.c.h.b16 %v463
    %v624 = vunpack.c.l.b16 %v464
    %v625 = vunpack.c.h.b16 %v464
    %v626 = vunpack.c.l.b16 %v465
    %v627 = vunpack.c.h.b16 %v465
    %v628 = vunpack.c.l.b16 %v466
    %v629 = vunpack.c.h.b16 %v466
    %v630 = vunpack.c.l.b16 %v467
    %v631 = vunpack.c.h.b16 %v467
    %v632 = vunpack.c.l.b16 %v468
    %v633 = vunpack.c.h.b16 %v468
    %v634 = vunpack.c.l.b16 %v469
    %v635 = vunpack.c.h.b16 %v469
    %v636 = vunpack.c.l.b16 %v470
    %v637 = vunpack.c.h.b16 %v470
    %v638 = vunpack.c.l.b16 %v471
    %v639 = vunpack.c.h.b16 %v471
    %v640 = vunpack.c.l.b16 %v472
    %v641 = vunpack.c.h.b16 %v472
    %v642 = vunpack.c.l.b16 %v473
    %v643 = vunpack.c.h.b16 %v473
    %v644 = vunpack.c.l.b16 %v474
    %v645 = vunpack.c.h.b16 %v474
    %v646 = vunpack.c.l.b16 %v475
    %v647 = vunpack.c.h.b16 %v475
    %v648 = vunpack.c.l.b16 %v476
    %v649 = vunpack.c.h.b16 %v476
    %v650 = vunpack.c.l.b16 %v477
    %v651 = vunpack.c.h.b16 %v477
    %v652 = vunpack.c.l.b16 %v478
    %v653 = vunpack.c.h.b16 %v478
    %v654 = vunpack.c.l.b16 %v479
    %v655 = vunpack.c.h.b16 %v479
    %v656 = vunpack.c.l.b16 %v480
    %v657 = vunpack.c.h.b16 %v480
    %v658 = vunpack.c.l.b16 %v481
    %v659 = vunpack.c.h.b16 %v481
    %v660 = vunpack.c.l.b16 %v482
    %v661 = vunpack.c.h.b16 %v482
    %v662 = vunpack.c.l.b16 %v483
    %v663 = vunpack.c.h.b16 %v483
    %v664 = vunpack.c.l.b16 %v484
    %v665 = vunpack.c.h.b16 %v484
    %v666 = vunpack.c.l.b16 %v485
    %v667 = vunpack.c.h.b16 %v485
    %v668 = vunpack.c.l.b16 %v486
    %v669 = vunpack.c.h.b16 %v486
    %v670 = vunpack.c.l.b16 %v487
    %v671 = vunpack.c.h.b16 %v487
    %v672 = vunpack.c.l.b16 %v488
    %v673 = vunpack.c.h.b16 %v488
    %v674 = vunpack.c.l.b16 %v489
    %v675 = vunpack.c.h.b16 %v489
    %v676 = vunpack.c.l.b16 %v490
    %v677 = vunpack.c.h.b16 %v490
    %v678 = vunpack.c.l.b16 %v491
    %v679 = vunpack.c.h.b16 %v491
    %v680 = vunpack.c.l.b16 %v492
    %v681 = vunpack.c.h.b16 %v492
    %v682 = vunpack.c.l.b16 %v493
    %v683 = vunpack.c.h.b16 %v493
    %v684 = vunpack.c.l.b16 %v494
    %v685 = vunpack.c.h.b16 %v494
    %v686 = vunpack.c.l.b16 %v495
    %v687 = vunpack.c.h.b16 %v495
    %v688 = vunpack.c.l.b16 %v496
    %v689 = vunpack.c.h.b16 %v496
    %v690 = vunpack.c.l.b16 %v497
    %v691 = vunpack.c.h.b16 %v497
    %v692 = vunpack.c.l.b16 %v498
    %v693 = vunpack.c.h.b16 %v498
    %v694 = vunpack.c.l.b16 %v499
    %v695 = vunpack.c.h.b16 %v499
    %v696 = vunpack.c.l.b16 %v500
    %v697 = vunpack.c.h.b16 %v500
    %v698 = vunpack.c.l.b16 %v501
    %v699 = vunpack.c.h.b16 %v501
    %v700 = vunpack.c.l.b16 %v502
    %v701 = vunpack.c.h.b16 %v502
    %v702 = vunpack.c.l.b16 %v503
    %v703 = vunpack.c.h.b16 %v503
    %v704 = vunpack.c.l.b16 %v504
    %v705 = vunpack.c.h.b16 %v504
    %v706 = vunpack.c.l.b16 %v505
    %v707 = vunpack.c.h.b16 %v505
    %v708 = vunpack.c.l.b16 %v506
    %v709 = vunpack.c.h.b16 %v506
    %v710 = vunpack.c.l.b16 %v507
    %v711 = vunpack.c.h.b16 %v507
    %v712 = vpack.c.b16 %v586, %v584
    %v713 = vpack.c.b16 %v587, %v585
    %v714 = vpack.c.b16 %v590, %v588
    %v715 = vpack.c.b16 %v591, %v589
    %v716 = vpack.c.b16 %v594, %v592
    %v717 = vpack.c.b16 %v595, %v593
    %v718 = vpack.c.b16 %v598, %v596
    %v719 = vpack.c.b16 %v599, %v597
    %v720 = vpack.c.b16 %v602, %v600
    %v721 = vpack.c.b16 %v603, %v601
    %v722 = vpack.c.b16 %v606, %v604
    %v723 = vpack.c.b16 %v607, %v605
    %v724 = vpack.c.b16 %v610, %v608
    %v725 = vpack.c.b16 %v611, %v609
    %v726 = vpack.c.b16 %v614, %v612
    %v727 = vpack.c.b16 %v615, %v613
    %v728 = vpack.c.b16 %v618, %v616
    %v729 = vpack.c.b16 %v619, %v617
    %v730 = vpack.c.b16 %v622, %v620
    %v731 = vpack.c.b16 %v623, %v621
    %v732 = vpack.c.b16 %v626, %v624
    %v733 = vpack.c.b16 %v627, %v625
    %v734 = vpack.c.b16 %v630, %v628
    %v735 = vpack.c.b16 %v631, %v629
    %v736 = vpack.c.b16 %v634, %v632
    %v737 = vpack.c.b16 %v635, %v633
    %v738 = vpack.c.b16 %v638, %v636
    %v739 = vpack.c.b16 %v639, %v637
    %v740 = vpack.c.b16 %v642, %v640
    %v741 = vpack.c.b16 %v643, %v641
    %v742 = vpack.c.b16 %v646, %v644
    %v743 = vpack.c.b16 %v647, %v645
    %v744 = vpack.c.b16 %v650, %v648
    %v745 = vpack.c.b16 %v651, %v649
    %v746 = vpack.c.b16 %v654, %v652
    %v747 = vpack.c.b16 %v655, %v653
    %v748 = vpack.c.b16 %v658, %v656
    %v749 = vpack.c.b16 %v659, %v657
    %v750 = vpack.c.b16 %v662, %v660
    %v751 = vpack.c.b16 %v663, %v661
    %v752 = vpack.c.b16 %v666, %v664
    %v753 = vpack.c.b16 %v667, %v665
    %v754 = vpack.c.b16 %v670, %v668
    %v755 = vpack.c.b16 %v671, %v669
    %v756 = vpack.c.b16 %v674, %v672
    %v757 = vpack.c.b16 %v675, %v673
    %v758 = vpack.c.b16 %v678, %v676
    %v759 = vpack.c.b16 %v679, %v677
    %v760 = vpack.c.b16 %v682, %v680
    %v761 = vpack.c.b16 %v683, %v681
    %v762 = vpack.c.b16 %v686, %v684
    %v763 = vpack.c.b16 %v687, %v685
    %v764 = vpack.c.b16 %v690, %v688
    %v765 = vpack.c.b16 %v691, %v689
    %v766 = vpack.c.b16 %v694, %v692
    %v767 = vpack.c.b16 %v695, %v693
    %v768 = vpack.c.b16 %v698, %v696
    %v769 = vpack.c.b16 %v699, %v697
    %v770 = vpack.c.b16 %v702, %v700
    %v771 = vpack.c.b16 %v703, %v701
    %v772 = vpack.c.b16 %v706, %v704
    %v773 = vpack.c.b16 %v707, %v705
    %v774 = vpack.c.b16 %v710, %v708
    %v775 = vpack.c.b16 %v711, %v709
    %840 = vmatprep.subr.bf16.mxu0 %v713
    %841 = vmatpush1.bf16.msra.mxu0 %v712
    %842 = vmatprep.subr.bf16.mxu0 %v715
    %843 = vmatpush1.bf16.msra.mxu0 %v714
    %844 = vmatprep.subr.bf16.mxu0 %v717
    %845 = vmatpush1.bf16.msra.mxu0 %v716
    %846 = vmatprep.subr.bf16.mxu0 %v719
    %847 = vmatpush1.bf16.msra.mxu0 %v718
    %848 = vmatprep.subr.bf16.mxu0 %v721
    %849 = vmatpush1.bf16.msra.mxu0 %v720
    %850 = vmatprep.subr.bf16.mxu0 %v723
    %851 = vmatpush1.bf16.msra.mxu0 %v722
    %852 = vmatprep.subr.bf16.mxu0 %v725
    %853 = vmatpush1.bf16.msra.mxu0 %v724
    %854 = vmatprep.subr.bf16.mxu0 %v727
    %855 = vmatpush1.bf16.msra.mxu0 %v726
    %856 = vmatprep.subr.bf16.mxu0 %v729
    %857 = vmatpush1.bf16.msra.mxu0 %v728
    %858 = vmatprep.subr.bf16.mxu0 %v731
    %859 = vmatpush1.bf16.msra.mxu0 %v730
    %860 = vmatprep.subr.bf16.mxu0 %v733
    %861 = vmatpush1.bf16.msra.mxu0 %v732
    %862 = vmatprep.subr.bf16.mxu0 %v735
    %863 = vmatpush1.bf16.msra.mxu0 %v734
    %864 = vmatprep.subr.bf16.mxu0 %v737
    %865 = vmatpush1.bf16.msra.mxu0 %v736
    %866 = vmatprep.subr.bf16.mxu0 %v739
    %867 = vmatpush1.bf16.msra.mxu0 %v738
    %868 = vmatprep.subr.bf16.mxu0 %v741
    %869 = vmatpush1.bf16.msra.mxu0 %v740
    %870 = vmatprep.subr.bf16.mxu0 %v743
    %871 = vmatpush1.bf16.msra.mxu0 %v742
    %872 = vmatprep.mubr.bf16.mxu0 %v441
    %873 = vmatmul.mubr.bf16.gmra.mrb[0].mxu0 %v440
    %v874 = vpop.f32.mrb[0].mxu0
    %v875 = vadd.f32 %v513, %v874
    %v876 = vpop.f32.mrb[0].mxu0
    %v877 = vadd.f32 %v517, %v876
    %v878 = vpop.f32.mrb[0].mxu0
    %v879 = vpop.f32.mrb[0].mxu0
    %880 = vdwg.mxu0
    %881 = vmatprep.subr.bf16.mxu0 %v745
    %882 = vmatpush1.bf16.msra.mxu0 %v744
    %883 = vmatprep.subr.bf16.mxu0 %v747
    %884 = vmatpush1.bf16.msra.mxu0 %v746
    %885 = vmatprep.subr.bf16.mxu0 %v749
    %886 = vmatpush1.bf16.msra.mxu0 %v748
    %887 = vmatprep.subr.bf16.mxu0 %v751
    %888 = vmatpush1.bf16.msra.mxu0 %v750
    %889 = vmatprep.subr.bf16.mxu0 %v753
    %890 = vmatpush1.bf16.msra.mxu0 %v752
    %891 = vmatprep.subr.bf16.mxu0 %v755
    %892 = vmatpush1.bf16.msra.mxu0 %v754
    %893 = vmatprep.subr.bf16.mxu0 %v757
    %894 = vmatpush1.bf16.msra.mxu0 %v756
    %895 = vmatprep.subr.bf16.mxu0 %v759
    %896 = vmatpush1.bf16.msra.mxu0 %v758
    %897 = vmatprep.subr.bf16.mxu0 %v761
    %898 = vmatpush1.bf16.msra.mxu0 %v760
    %899 = vmatprep.subr.bf16.mxu0 %v763
    %900 = vmatpush1.bf16.msra.mxu0 %v762
    %901 = vmatprep.subr.bf16.mxu0 %v765
    %902 = vmatpush1.bf16.msra.mxu0 %v764
    %903 = vmatprep.subr.bf16.mxu0 %v767
    %904 = vmatpush1.bf16.msra.mxu0 %v766
    %905 = vmatprep.subr.bf16.mxu0 %v769
    %906 = vmatpush1.bf16.msra.mxu0 %v768
    %907 = vmatprep.subr.bf16.mxu0 %v771
    %908 = vmatpush1.bf16.msra.mxu0 %v770
    %909 = vmatprep.subr.bf16.mxu0 %v773
    %910 = vmatpush1.bf16.msra.mxu0 %v772
    %911 = vmatprep.subr.bf16.mxu0 %v775
    %912 = vmatpush1.bf16.msra.mxu0 %v774
    %913 = vmatprep.mubr.bf16.mxu0 %v443
    %914 = vmatmul.mubr.bf16.gmra.mrb[0].mxu0 %v442
    %v915 = vpop.f32.mrb[0].mxu0
    %v916 = vadd.f32 %v875, %v915
    %v917 = vpop.f32.mrb[0].mxu0
    %v918 = vadd.f32 %v877, %v917
    %v919 = vpop.f32.mrb[0].mxu0
    %v920 = vpop.f32.mrb[0].mxu0
    %921 = vdwg.mxu0
    %v922 = vpack.c.bf16 %v916, %v916
    %v923 = vpack.c.bf16 %v918, %v918
    %v924 = vsub.bf16 0, %v922
    %v925 = vsub.bf16 0, %v923
    %v927 = vmul.bf16 %v924, 1069105081
    %v928 = vpow.bf16.pop %v927
    %v930 = vmul.bf16 %v925, 1069105081
    %v931 = vpow.bf16.pop %v930
    %v932 = vunpack.c.l.bf16 %v928
    %v933 = vunpack.c.l.bf16 %v931
    %v934 = vadd.f32 %v932, 1.0
    %v935 = vadd.f32 %v933, 1.0
    %v936 = vrcp.pop %v934
    %v937 = vrcp.pop %v935
    %v938 = vpack.c.bf16 %v936, %v936
    %v939 = vpack.c.bf16 %v937, %v937
    %v940 = vld [vmem:[%s5] sm:$0xf]
    %v941 = vld [vmem:[%s5 + $0x4] sm:$0xf]
    %v942 = vld [vmem:[%s5 + $0x8] sm:$0xf]
    %v943 = vld [vmem:[%s5 + $0xc] sm:$0xf]
    %v944 = vld [vmem:[%s5 + $0x10] sm:$0xf]
    %v945 = vld [vmem:[%s5 + $0x14] sm:$0xf]
    %v946 = vld [vmem:[%s5 + $0x18] sm:$0xf]
    %v947 = vld [vmem:[%s5 + $0x1c] sm:$0xf]
    %v948 = vld [vmem:[%s5 + $0x20] sm:$0xf]
    %v949 = vld [vmem:[%s5 + $0x24] sm:$0xf]
    %v950 = vld [vmem:[%s5 + $0x28] sm:$0xf]
    %v951 = vld [vmem:[%s5 + $0x2c] sm:$0xf]
    %v952 = vld [vmem:[%s5 + $0x30] sm:$0xf]
    %v953 = vld [vmem:[%s5 + $0x34] sm:$0xf]
    %v954 = vld [vmem:[%s5 + $0x38] sm:$0xf]
    %v955 = vld [vmem:[%s5 + $0x3c] sm:$0xf]
    %v956 = vld [vmem:[%s5 + $0x40] sm:$0xf]
    %v957 = vld [vmem:[%s5 + $0x44] sm:$0xf]
    %v958 = vld [vmem:[%s5 + $0x48] sm:$0xf]
    %v959 = vld [vmem:[%s5 + $0x4c] sm:$0xf]
    %v960 = vld [vmem:[%s5 + $0x50] sm:$0xf]
    %v961 = vld [vmem:[%s5 + $0x54] sm:$0xf]
    %v962 = vld [vmem:[%s5 + $0x58] sm:$0xf]
    %v963 = vld [vmem:[%s5 + $0x5c] sm:$0xf]
    %v964 = vld [vmem:[%s5 + $0x60] sm:$0xf]
    %v965 = vld [vmem:[%s5 + $0x64] sm:$0xf]
    %v966 = vld [vmem:[%s5 + $0x68] sm:$0xf]
    %v967 = vld [vmem:[%s5 + $0x6c] sm:$0xf]
    %v968 = vld [vmem:[%s5 + $0x70] sm:$0xf]
    %v969 = vld [vmem:[%s5 + $0x74] sm:$0xf]
    %v970 = vld [vmem:[%s5 + $0x78] sm:$0xf]
    %v971 = vld [vmem:[%s5 + $0x7c] sm:$0xf]
    %v972 = vld [vmem:[%s6] sm:$0x1]
    %v974 = vlaneseq
    %v975 = vshrl.u32 %v974, 7
    %v976 = vsub.s32 0, %v975
    %v977 = vrot.slane %v972, %v976
    %v1011 = vunpack.c.l.b16 %v940
    %v1012 = vunpack.c.l.b16 %v941
    %v1013 = vunpack.c.l.b16 %v942
    %v1014 = vunpack.c.l.b16 %v943
    %v1015 = vunpack.c.l.b16 %v944
    %v1016 = vunpack.c.l.b16 %v945
    %v1017 = vunpack.c.l.b16 %v946
    %v1018 = vunpack.c.l.b16 %v947
    %v1019 = vunpack.c.l.b16 %v948
    %v1020 = vunpack.c.l.b16 %v949
    %v1021 = vunpack.c.l.b16 %v950
    %v1022 = vunpack.c.l.b16 %v951
    %v1023 = vunpack.c.l.b16 %v952
    %v1024 = vunpack.c.l.b16 %v953
    %v1025 = vunpack.c.l.b16 %v954
    %v1026 = vunpack.c.l.b16 %v955
    %v1027 = vunpack.c.l.b16 %v956
    %v1028 = vunpack.c.l.b16 %v957
    %v1029 = vunpack.c.l.b16 %v958
    %v1030 = vunpack.c.l.b16 %v959
    %v1031 = vunpack.c.l.b16 %v960
    %v1032 = vunpack.c.l.b16 %v961
    %v1033 = vunpack.c.l.b16 %v962
    %v1034 = vunpack.c.l.b16 %v963
    %v1035 = vunpack.c.l.b16 %v964
    %v1036 = vunpack.c.l.b16 %v965
    %v1037 = vunpack.c.l.b16 %v966
    %v1038 = vunpack.c.l.b16 %v967
    %v1039 = vunpack.c.l.b16 %v968
    %v1040 = vunpack.c.l.b16 %v969
    %v1041 = vunpack.c.l.b16 %v970
    %v1042 = vunpack.c.l.b16 %v971
    %v1043 = vpack.c.b16 %v1012, %v1011
    %v1044 = vpack.c.b16 %v1014, %v1013
    %v1045 = vpack.c.b16 %v1016, %v1015
    %v1046 = vpack.c.b16 %v1018, %v1017
    %v1047 = vpack.c.b16 %v1020, %v1019
    %v1048 = vpack.c.b16 %v1022, %v1021
    %v1049 = vpack.c.b16 %v1024, %v1023
    %v1050 = vpack.c.b16 %v1026, %v1025
    %v1051 = vpack.c.b16 %v1028, %v1027
    %v1052 = vpack.c.b16 %v1030, %v1029
    %v1053 = vpack.c.b16 %v1032, %v1031
    %v1054 = vpack.c.b16 %v1034, %v1033
    %v1055 = vpack.c.b16 %v1036, %v1035
    %v1056 = vpack.c.b16 %v1038, %v1037
    %v1057 = vpack.c.b16 %v1040, %v1039
    %v1058 = vpack.c.b16 %v1042, %v1041
    %1075 = vmatprep.subr.bf16.mxu0 0
    %1076 = vmatpush1.bf16.msra.mxu0 %v1043
    %1077 = vmatprep.subr.bf16.mxu0 0
    %1078 = vmatpush1.bf16.msra.mxu0 %v1044
    %1079 = vmatprep.subr.bf16.mxu0 0
    %1080 = vmatpush1.bf16.msra.mxu0 %v1045
    %1081 = vmatprep.subr.bf16.mxu0 0
    %1082 = vmatpush1.bf16.msra.mxu0 %v1046
    %1083 = vmatprep.subr.bf16.mxu0 0
    %1084 = vmatpush1.bf16.msra.mxu0 %v1047
    %1085 = vmatprep.subr.bf16.mxu0 0
    %1086 = vmatpush1.bf16.msra.mxu0 %v1048
    %1087 = vmatprep.subr.bf16.mxu0 0
    %1088 = vmatpush1.bf16.msra.mxu0 %v1049
    %1089 = vmatprep.subr.bf16.mxu0 0
    %1090 = vmatpush1.bf16.msra.mxu0 %v1050
    %1091 = vmatprep.subr.bf16.mxu0 0
    %1092 = vmatpush1.bf16.msra.mxu0 %v1051
    %1093 = vmatprep.subr.bf16.mxu0 0
    %1094 = vmatpush1.bf16.msra.mxu0 %v1052
    %1095 = vmatprep.subr.bf16.mxu0 0
    %1096 = vmatpush1.bf16.msra.mxu0 %v1053
    %1097 = vmatprep.subr.bf16.mxu0 0
    %1098 = vmatpush1.bf16.msra.mxu0 %v1054
    %1099 = vmatprep.subr.bf16.mxu0 0
    %1100 = vmatpush1.bf16.msra.mxu0 %v1055
    %1101 = vmatprep.subr.bf16.mxu0 0
    %1102 = vmatpush1.bf16.msra.mxu0 %v1056
    %1103 = vmatprep.subr.bf16.mxu0 0
    %1104 = vmatpush1.bf16.msra.mxu0 %v1057
    %1105 = vmatprep.subr.bf16.mxu0 0
    %1106 = vmatpush1.bf16.msra.mxu0 %v1058
    %1107 = vmatprep.mubr.bf16.mxu0 %v939
    %1108 = vmatmul.mubr.bf16.gmra.mrb[0].mxu0 %v938
    %v1109 = vpop.f32.mrb[0].mxu0
    %v1110 = vadd.f32 %v977, %v1109
    %v1111 = vpop.f32.mrb[0].mxu0
    %v1112 = vpop.f32.mrb[0].mxu0
    %v1113 = vpop.f32.mrb[0].mxu0
    %1114 = vdwg.mxu0
    %vm1115 = vcmask 80896
    %1116 = vst.msk [vmem:[#allocation7] sm:$0xff] %vm1115, %v1110
    // Predicated region
    $region38: #{dnn_forward.1} parent=1 // pred_check
      _
    $region39: #{dnn_forward.1} parent=1 // pred_check_branch
      %1118 = sbr.rel (0) target = $region41
    $region40: #{dnn_forward.1} parent=1 // pred_region
      %s1120 = ssub.s32 128, 128
      %1121 = vsyncadd [#allocation4], %s1120
      %s1123 = sshll.u32 [#allocation7], 4
      %s1124 = int_to_ptr.vmem [resolvable:$true] %s1123
      %1126 = dma.vmem_to_hbm [thread:$0]  %s1124, 128, %s7, [#allocation4]
    $region41: #{dnn_forward.1} parent=1 // pred_fallthru
      _
    // Predicated region
    $region42: #{dnn_forward.1} parent=1 // pred_check
      _
    $region43: #{dnn_forward.1} parent=1 // pred_check_branch
      %1128 = sbr.rel (0) target = $region45
    $region44: #{dnn_forward.1} parent=1 // pred_region
      %1129 = dma.done [#allocation4], 128
    $region45: #{dnn_forward.1} parent=1 // pred_fallthru
      _
    %1130 = vsyncpa [#allocation3], 1
    %1131 = vsyncpa [#allocation6], 1
    %1132 = vsyncpa [#allocation4], 1

</llo_original>
